<compile_context>
chip_gen: v5e
topology: v5e:2x2
jax: 0.10.0
libtpu: 0.0.40
codegen_flags: <defaults>
</compile_context>

<pallas_src>
import functools

import jax
import jax.numpy as jnp
from jax.experimental import pallas as pl
from jax.experimental.pallas import tpu as pltpu


def _round_up(x, m):
    return (x + m - 1) // m * m


# ---------------------------------------------------------------------------
# Kernel
# ---------------------------------------------------------------------------
def pgnet_kernel(x_ref, w1_ref, b1_ref, w2_ref, b2_ref, w3_ref, b3_ref, o_ref):
    cdt = w1_ref.dtype                      # matmul-operand dtype (bf16 or f32)

    # x arrives f32; cast to the operand dtype on the VPU (free under the MXU).
    x = x_ref[...].astype(cdt)                                      # (TM, H*W)

    # fc1 + relu1 -- MXU accumulates in f32; bias / ReLU stay f32.
    h1 = jnp.dot(x, w1_ref[...], preferred_element_type=jnp.float32) + b1_ref[...]
    h1 = jnp.maximum(h1, 0.0)                                       # (TM, 512)

    # fc2 + relu2
    h2 = jnp.dot(h1.astype(cdt), w2_ref[...],
                 preferred_element_type=jnp.float32) + b2_ref[...]
    h2 = jnp.maximum(h2, 0.0)                                       # (TM, 256)

    # output linear (action dim lane-padded to 128; padded bias = -1e30 gives
    # exactly zero softmax mass on the padded lanes in f32).
    scores = jnp.dot(h2.astype(cdt), w3_ref[...],
                     preferred_element_type=jnp.float32) + b3_ref[...]  # (TM,128)

    # softmax over dim=1 -- exact divide (approx reciprocal caused ~1e-3
    # sum-to-1 drift; exactness is free under the matmuls).
    m = jnp.max(scores, axis=-1, keepdims=True)
    e = jnp.exp(scores - m)
    s = jnp.sum(e, axis=-1, keepdims=True)
    o_ref[...] = (e / s).astype(o_ref.dtype)


# ---------------------------------------------------------------------------
# One-time parameter preparation (hoisted out of the per-call path)
# ---------------------------------------------------------------------------
def prepare_params(params, compute_dtype=jnp.bfloat16):
    """Lane-pad the action dim and cast matmul operands ONCE; reuse the result
    across forward calls.  Returns (prepared_arrays, n_actions)."""
    w1, b1, w2, b2, w3, b3 = params
    n_actions = w3.shape[1]
    n_pad = _round_up(n_actions, 128)

    w3p = jnp.zeros((w3.shape[0], n_pad), w3.dtype).at[:, :n_actions].set(w3)
    # -1e30 padded bias: safe in f32/bf16 scores only (exp underflows to 0).
    b3p = jnp.full((1, n_pad), -1e30, jnp.float32).at[:, :n_actions].set(
        b3.reshape(1, -1).astype(jnp.float32))

    cdt = compute_dtype
    prepared = (w1.astype(cdt), b1.astype(jnp.float32),
                w2.astype(cdt), b2.astype(jnp.float32),
                w3p.astype(cdt), b3p)
    return prepared, n_actions


def _pick_batch_tile(batch, tm_max, sublane=16):
    """Batch tile / padded batch: tiles are multiples of 16 rows (bf16-safe),
    large tiles amortize per-grid-step overhead, and batches > 128 rows are
    split into >= 2 tiles so both v7x TensorCores get work."""
    b_min = _round_up(batch, sublane)
    n_tiles = max(1, pl.cdiv(b_min, tm_max))
    if n_tiles == 1 and b_min > 128:
        n_tiles = 2                       # v7x: let "parallel" use both TCs
    tm = _round_up(pl.cdiv(b_min, n_tiles), sublane)
    return tm, tm * n_tiles


# ---------------------------------------------------------------------------
# Forward
# ---------------------------------------------------------------------------
@functools.partial(jax.jit, static_argnames=("n_actions", "tm"))
def pgnet_forward(x, prepared, n_actions, *, tm=512):
    """x: (B, H, W) (or (B, H*W)) float32.  Returns softmax probs (B, n_actions)."""
    w1c, b1, w2c, b2, w3c, b3p = prepared
    in_dim = w1c.shape[0]
    n_pad = w3c.shape[1]

    x2d = x.reshape(-1, in_dim)           # same as torch x.view(-1, H*W); f32
    B = x2d.shape[0]

    tm_eff, b_pad = _pick_batch_tile(B, tm)
    if b_pad != B:
        x2d = jnp.pad(x2d, ((0, b_pad - B), (0, 0)))

    grid = (b_pad // tm_eff,)

    # weights / biases: constant block index -> VMEM-resident across the grid
    resident = lambda a: pl.BlockSpec(a.shape, lambda i: (0,) * a.ndim)

    out = pl.pallas_call(
        pgnet_kernel,
        out_shape=jax.ShapeDtypeStruct((b_pad, n_pad), jnp.float32),
        grid=grid,
        in_specs=[
            pl.BlockSpec((tm_eff, in_dim), lambda i: (i, 0)),   # x batch tile
            resident(w1c), resident(b1),
            resident(w2c), resident(b2),
            resident(w3c), resident(b3p),
        ],
        out_specs=pl.BlockSpec((tm_eff, n_pad), lambda i: (i, 0)),
        compiler_params=pltpu.CompilerParams(
            dimension_semantics=("parallel",)),   # v7x: shard batch over 2 TCs
    )(x2d, w1c, b1, w2c, b2, w3c, b3p)

    return out[:B, :n_actions]


def init_params(key, in_dim, n_actions):
    """Deterministic init matching nn.Linear shapes; weights stored (in, out)."""
    ks = jax.random.split(key, 6)

    def lin(kw, kb, fan_in, fan_out):
        bound = 1.0 / jnp.sqrt(fan_in)
        w = jax.random.uniform(kw, (fan_in, fan_out), jnp.float32, -bound, bound)
        b = jax.random.uniform(kb, (1, fan_out), jnp.float32, -bound, bound)
        return w, b

    w1, b1 = lin(ks[0], ks[1], in_dim, 512)
    w2, b2 = lin(ks[2], ks[3], 512, 256)
    w3, b3 = lin(ks[4], ks[5], 256, n_actions)
    return (w1, b1, w2, b2, w3, b3)


if __name__ == "__main__":
    key = jax.random.PRNGKey(0)
    k_x, k_p = jax.random.split(key)

    # env.observation_space.shape = (16, 16), env.action_space.n = 8
    B, H, W, n_actions = 2, 16, 16, 8
    x = jax.random.normal(k_x, (B, H, W), jnp.float32)
    params = init_params(k_p, H * W, n_actions)

    # plain-JAX reference
    w1, b1, w2, b2, w3, b3 = params
    xf = x.reshape(B, H * W)
    h1 = jnp.maximum(xf @ w1 + b1, 0.0)
    h2 = jnp.maximum(h1 @ w2 + b2, 0.0)
    ref = jax.nn.softmax(h2 @ w3 + b3, axis=1)

    # ---- f32 operand path (reference-accurate) ----
    prep_f32, na = prepare_params(params, compute_dtype=jnp.float32)
    probs = pgnet_forward(x, prep_f32, na)
    jax.block_until_ready(probs)
    assert probs.shape == (B, n_actions)
    assert jnp.allclose(probs, ref, atol=2e-3), "mismatch vs reference (f32 path)"
    assert jnp.allclose(jnp.sum(probs, axis=1), 1.0, atol=1e-4), "f32 probs not normalized"

    # ---- default bf16 operand path (f32 accumulation / softmax) ----
    prep_bf16, na = prepare_params(params)           # compute_dtype=bfloat16
    probs_bf16 = pgnet_forward(x, prep_bf16, na)
    jax.block_until_ready(probs_bf16)
    assert probs_bf16.shape == (B, n_actions)
    assert jnp.allclose(probs_bf16, ref, atol=3e-2), "mismatch vs reference (bf16 path)"
    assert jnp.allclose(jnp.sum(probs_bf16, axis=1), 1.0, atol=1e-4), "bf16 probs not normalized"

    print("KERNEL_OK")
</pallas_src>

<mosaic_0001>
module attributes {stable_mosaic.version = 11 : i64} {
  func.func @pgnet_kernel(%arg0: i32, %arg1: memref<16x256xf32, #tpu.memory_space<vmem>>, %arg2: memref<256x512xf32, #tpu.memory_space<vmem>>, %arg3: memref<1x512xf32, #tpu.memory_space<vmem>>, %arg4: memref<512x256xf32, #tpu.memory_space<vmem>>, %arg5: memref<1x256xf32, #tpu.memory_space<vmem>>, %arg6: memref<256x128xf32, #tpu.memory_space<vmem>>, %arg7: memref<1x128xf32, #tpu.memory_space<vmem>>, %arg8: memref<16x128xf32, #tpu.memory_space<vmem>>) attributes {dimension_semantics = [#tpu.dimension_semantics<parallel>], iteration_bounds = array<i64: 1>, scalar_prefetch = 0 : i64, scratch_operands = 0 : i64, tpu.core_type = #tpu.core_type<tc>, window_params = [{transform_indices = @transform_0, window_bounds = array<i64: 16, 256>}, {pipeline_mode = #tpu.pipeline_mode<synchronous>, transform_indices = @transform_1, window_bounds = array<i64: 256, 512>}, {pipeline_mode = #tpu.pipeline_mode<synchronous>, transform_indices = @transform_2, window_bounds = array<i64: 1, 512>}, {pipeline_mode = #tpu.pipeline_mode<synchronous>, transform_indices = @transform_3, window_bounds = array<i64: 512, 256>}, {pipeline_mode = #tpu.pipeline_mode<synchronous>, transform_indices = @transform_4, window_bounds = array<i64: 1, 256>}, {pipeline_mode = #tpu.pipeline_mode<synchronous>, transform_indices = @transform_5, window_bounds = array<i64: 256, 128>}, {pipeline_mode = #tpu.pipeline_mode<synchronous>, transform_indices = @transform_6, window_bounds = array<i64: 1, 128>}, {transform_indices = @transform_7, window_bounds = array<i64: 16, 128>}]} {
    %c0 = arith.constant 0 : index
    %c0_0 = arith.constant 0 : index
    %0 = vector.load %arg1[%c0, %c0_0] : memref<16x256xf32, #tpu.memory_space<vmem>>, vector<16x256xf32>
    %c0_1 = arith.constant 0 : index
    %c0_2 = arith.constant 0 : index
    %1 = vector.load %arg2[%c0_1, %c0_2] : memref<256x512xf32, #tpu.memory_space<vmem>>, vector<256x512xf32>
    %cst = arith.constant dense<0.000000e+00> : vector<16x512xf32>
    %2 = tpu.matmul %0, %1, %cst {dimension_numbers = #tpu.dot_dimension_numbers<[1], [0], [0], [1], [0, 0, 1, 1], [], []>} : vector<16x256xf32>, vector<256x512xf32>, vector<16x512xf32> -> vector<16x512xf32>
    %c0_3 = arith.constant 0 : index
    %c0_4 = arith.constant 0 : index
    %3 = vector.load %arg3[%c0_3, %c0_4] : memref<1x512xf32, #tpu.memory_space<vmem>>, vector<1x512xf32>
    %4 = vector.broadcast %3 : vector<1x512xf32> to vector<16x512xf32>
    %5 = arith.addf %2, %4 : vector<16x512xf32>
    %cst_5 = arith.constant 0.000000e+00 : f32
    %6 = vector.broadcast %cst_5 : f32 to vector<16x512xf32>
    %7 = arith.maximumf %5, %6 : vector<16x512xf32>
    %c0_6 = arith.constant 0 : index
    %c0_7 = arith.constant 0 : index
    %8 = vector.load %arg4[%c0_6, %c0_7] : memref<512x256xf32, #tpu.memory_space<vmem>>, vector<512x256xf32>
    %cst_8 = arith.constant dense<0.000000e+00> : vector<16x256xf32>
    %9 = tpu.matmul %7, %8, %cst_8 {dimension_numbers = #tpu.dot_dimension_numbers<[1], [0], [0], [1], [0, 0, 1, 1], [], []>} : vector<16x512xf32>, vector<512x256xf32>, vector<16x256xf32> -> vector<16x256xf32>
    %c0_9 = arith.constant 0 : index
    %c0_10 = arith.constant 0 : index
    %10 = vector.load %arg5[%c0_9, %c0_10] : memref<1x256xf32, #tpu.memory_space<vmem>>, vector<1x256xf32>
    %11 = vector.broadcast %10 : vector<1x256xf32> to vector<16x256xf32>
    %12 = arith.addf %9, %11 : vector<16x256xf32>
    %cst_11 = arith.constant 0.000000e+00 : f32
    %13 = vector.broadcast %cst_11 : f32 to vector<16x256xf32>
    %14 = arith.maximumf %12, %13 : vector<16x256xf32>
    %c0_12 = arith.constant 0 : index
    %c0_13 = arith.constant 0 : index
    %15 = vector.load %arg6[%c0_12, %c0_13] : memref<256x128xf32, #tpu.memory_space<vmem>>, vector<256x128xf32>
    %cst_14 = arith.constant dense<0.000000e+00> : vector<16x128xf32>
    %16 = tpu.matmul %14, %15, %cst_14 {dimension_numbers = #tpu.dot_dimension_numbers<[1], [0], [0], [1], [0, 0, 1, 1], [], []>} : vector<16x256xf32>, vector<256x128xf32>, vector<16x128xf32> -> vector<16x128xf32>
    %c0_15 = arith.constant 0 : index
    %c0_16 = arith.constant 0 : index
    %17 = vector.load %arg7[%c0_15, %c0_16] : memref<1x128xf32, #tpu.memory_space<vmem>>, vector<1x128xf32>
    %18 = vector.broadcast %17 : vector<1x128xf32> to vector<16x128xf32>
    %19 = arith.addf %16, %18 : vector<16x128xf32>
    %cst_17 = arith.constant dense<0xFF800000> : vector<16xf32>
    %20 = vector.multi_reduction <maximumf>, %19, %cst_17 [1] : vector<16x128xf32> to vector<16xf32>
    %21 = vector.shape_cast %20 : vector<16xf32> to vector<16x1xf32>
    %22 = vector.broadcast %21 : vector<16x1xf32> to vector<16x128xf32>
    %23 = arith.subf %19, %22 : vector<16x128xf32>
    %24 = math.exp %23 : vector<16x128xf32>
    %cst_18 = arith.constant dense<0.000000e+00> : vector<16xf32>
    %25 = vector.multi_reduction <add>, %24, %cst_18 [1] : vector<16x128xf32> to vector<16xf32>
    %26 = vector.shape_cast %25 : vector<16xf32> to vector<16x1xf32>
    %27 = vector.broadcast %26 : vector<16x1xf32> to vector<16x128xf32>
    %28 = arith.divf %24, %27 : vector<16x128xf32>
    %c0_19 = arith.constant 0 : index
    %c0_20 = arith.constant 0 : index
    %29 = vector.load %arg8[%c0_19, %c0_20] : memref<16x128xf32, #tpu.memory_space<vmem>>, vector<16x128xf32>
    tpu.vector_store %arg8[%c0_19, %c0_20], %28 {strides = array<i32>} : memref<16x128xf32, #tpu.memory_space<vmem>>, vector<16x128xf32>,
    return
  }
  func.func @transform_0(%arg0: i32) -> (i32, i32) {
    %c0_i32 = arith.constant 0 : i32
    %c0_i32_0 = arith.constant 0 : i32
    return %arg0, %c0_i32 : i32, i32
  }
  func.func @transform_1(%arg0: i32) -> (i32, i32) {
    %c0_i32 = arith.constant 0 : i32
    %c0_i32_0 = arith.constant 0 : i32
    %c0_i32_1 = arith.constant 0 : i32
    return %c0_i32, %c0_i32_0 : i32, i32
  }
  func.func @transform_2(%arg0: i32) -> (i32, i32) {
    %c0_i32 = arith.constant 0 : i32
    %c0_i32_0 = arith.constant 0 : i32
    %c0_i32_1 = arith.constant 0 : i32
    return %c0_i32, %c0_i32_0 : i32, i32
  }
  func.func @transform_3(%arg0: i32) -> (i32, i32) {
    %c0_i32 = arith.constant 0 : i32
    %c0_i32_0 = arith.constant 0 : i32
    %c0_i32_1 = arith.constant 0 : i32
    return %c0_i32, %c0_i32_0 : i32, i32
  }
  func.func @transform_4(%arg0: i32) -> (i32, i32) {
    %c0_i32 = arith.constant 0 : i32
    %c0_i32_0 = arith.constant 0 : i32
    %c0_i32_1 = arith.constant 0 : i32
    return %c0_i32, %c0_i32_0 : i32, i32
  }
  func.func @transform_5(%arg0: i32) -> (i32, i32) {
    %c0_i32 = arith.constant 0 : i32
    %c0_i32_0 = arith.constant 0 : i32
    %c0_i32_1 = arith.constant 0 : i32
    return %c0_i32, %c0_i32_0 : i32, i32
  }
  func.func @transform_6(%arg0: i32) -> (i32, i32) {
    %c0_i32 = arith.constant 0 : i32
    %c0_i32_0 = arith.constant 0 : i32
    %c0_i32_1 = arith.constant 0 : i32
    return %c0_i32, %c0_i32_0 : i32, i32
  }
  func.func @transform_7(%arg0: i32) -> (i32, i32) {
    %c0_i32 = arith.constant 0 : i32
    %c0_i32_0 = arith.constant 0 : i32
    return %arg0, %c0_i32 : i32, i32
  }
}

</mosaic_0001>

<llo_original>
// kernel: pgnet_forward.1
$region0: #{pgnet_forward.1}
  #allocation0 [shape = 'u32[]', space=smem, size = 0x4, offset = 0x4, fixed_abs, tag = 'smem constant byte address 0x4 - core index']
  #allocation1 [shape = 'u32[72,128]{1,0:T(1,128)}', space=vmem, size = 0x9000, scoped, tag = 'internal scratch']
  %s0 = inlined_call_operand.vmem [shape: f32[16,256], index: 0, kind: input, shape index: {}]
  %s1 = inlined_call_operand.hbm [shape: f32[256,512], index: 1, kind: input, shape index: {}]
  %s2 = inlined_call_operand.vmem [shape: f32[1,512], index: 2, kind: input, shape index: {}]
  %s3 = inlined_call_operand.hbm [shape: f32[512,256], index: 3, kind: input, shape index: {}]
  %s4 = inlined_call_operand.vmem [shape: f32[1,256], index: 4, kind: input, shape index: {}]
  %s5 = inlined_call_operand.hbm [shape: f32[256,128], index: 5, kind: input, shape index: {}]
  %s6 = inlined_call_operand.vmem [shape: f32[1,128], index: 6, kind: input, shape index: {}]
  %s7 = inlined_call_operand.vmem [shape: f32[16,128], index: 7, kind: output, shape index: {}]
  %s8 = sld [smem:[#allocation0]]
  $region50: #{pgnet_forward.1} parent=0
    _
  %s10 = ssub.s32 1, %s8
  %s11 = scalar_select 0, %s10, %s8
  $region1: #{pgnet_forward.1} parent=0
    #allocation2 [shape = 'u8[524288]{0}', space=vmem, size = 0x80000, scoped, tag = 'input window, operand 1, single buffered']
    #allocation3 [shape = 's32[1]{0}', space=sflag, size = 0x4, scoped, tag = 'scoped memory for pgnet_forward.1']
    #allocation4 [shape = 'u8[524288]{0}', space=vmem, size = 0x80000, scoped, tag = 'input window, operand 3, single buffered']
    #allocation5 [shape = 's32[1]{0}', space=sflag, size = 0x4, scoped, tag = 'scoped memory for pgnet_forward.1']
    #allocation6 [shape = 'u8[131072]{0}', space=vmem, size = 0x20000, scoped, tag = 'input window, operand 5, single buffered']
    %12 = vsyncpa [#allocation3], 0
    %13 = vsyncpa [#allocation5], 0
    // Predicated region
    $region2: #{pgnet_forward.1} parent=1 // pred_check
      _
    $region3: #{pgnet_forward.1} parent=1 // pred_check_branch
      %15 = sbr.rel (0) target = $region5
    $region4: #{pgnet_forward.1} parent=1 // pred_region
      _
    $region5: #{pgnet_forward.1} parent=1 // pred_fallthru
      _
    // Predicated region
    $region6: #{pgnet_forward.1} parent=1 // pred_check
      _
    $region7: #{pgnet_forward.1} parent=1 // pred_check_branch
      %17 = sbr.rel (0) target = $region9
    $region8: #{pgnet_forward.1} parent=1 // pred_region
      %19 = vsyncadd [#allocation3], 0
      %s20 = sshll.u32 %s1, 4
      %s21 = int_to_ptr.hbm [resolvable:$true] %s20
      %s22 = sshll.u32 [#allocation2], 4
      %s23 = int_to_ptr.vmem [resolvable:$true] %s22
      %28 = dma.hbm_to_vmem [thread:$0]  %s21, 16384, %s23, [#allocation3], 512, 512, 32
    $region9: #{pgnet_forward.1} parent=1 // pred_fallthru
      _
    // Predicated region
    $region10: #{pgnet_forward.1} parent=1 // pred_check
      _
    $region11: #{pgnet_forward.1} parent=1 // pred_check_branch
      %30 = sbr.rel (0) target = $region13
    $region12: #{pgnet_forward.1} parent=1 // pred_region
      _
    $region13: #{pgnet_forward.1} parent=1 // pred_fallthru
      _
    // Predicated region
    $region14: #{pgnet_forward.1} parent=1 // pred_check
      _
    $region15: #{pgnet_forward.1} parent=1 // pred_check_branch
      %32 = sbr.rel (0) target = $region17
    $region16: #{pgnet_forward.1} parent=1 // pred_region
      %34 = vsyncadd [#allocation5], 0
      %s35 = sshll.u32 %s3, 4
      %s36 = int_to_ptr.hbm [resolvable:$true] %s35
      %s37 = sshll.u32 [#allocation4], 4
      %s38 = int_to_ptr.vmem [resolvable:$true] %s37
      %43 = dma.hbm_to_vmem [thread:$0]  %s36, 16384, %s38, [#allocation5], 256, 256, 16
    $region17: #{pgnet_forward.1} parent=1 // pred_fallthru
      _
    // Predicated region
    $region18: #{pgnet_forward.1} parent=1 // pred_check
      _
    $region19: #{pgnet_forward.1} parent=1 // pred_check_branch
      %45 = sbr.rel (0) target = $region21
    $region20: #{pgnet_forward.1} parent=1 // pred_region
      _
    $region21: #{pgnet_forward.1} parent=1 // pred_fallthru
      _
    // Predicated region
    $region22: #{pgnet_forward.1} parent=1 // pred_check
      _
    $region23: #{pgnet_forward.1} parent=1 // pred_check_branch
      %47 = sbr.rel (0) target = $region25
    $region24: #{pgnet_forward.1} parent=1 // pred_region
      %49 = vsyncadd [#allocation5], 0
      %s50 = sshll.u32 %s5, 4
      %s51 = int_to_ptr.hbm [resolvable:$true] %s50
      %s52 = sshll.u32 [#allocation6], 4
      %s53 = int_to_ptr.vmem [resolvable:$true] %s52
      %58 = dma.hbm_to_vmem [thread:$0]  %s51, 4096, %s53, [#allocation5], 128, 128, 8
    $region25: #{pgnet_forward.1} parent=1 // pred_fallthru
      _
    // Predicated region
    $region26: #{pgnet_forward.1} parent=1 // pred_check
      _
    $region27: #{pgnet_forward.1} parent=1 // pred_check_branch
      %60 = sbr.rel (0) target = $region29
    $region28: #{pgnet_forward.1} parent=1 // pred_region
      _
    $region29: #{pgnet_forward.1} parent=1 // pred_fallthru
      _
    // Predicated region
    $region30: #{pgnet_forward.1} parent=1 // pred_check
      _
    $region31: #{pgnet_forward.1} parent=1 // pred_check_branch
      %62 = sbr.rel (0) target = $region33
    $region32: #{pgnet_forward.1} parent=1 // pred_region
      %64 = dma.done [#allocation3], 16384
    $region33: #{pgnet_forward.1} parent=1 // pred_fallthru
      _
    // Predicated region
    $region34: #{pgnet_forward.1} parent=1 // pred_check
      _
    $region35: #{pgnet_forward.1} parent=1 // pred_check_branch
      %66 = sbr.rel (0) target = $region37
    $region36: #{pgnet_forward.1} parent=1 // pred_region
      %68 = dma.done [#allocation5], 16384
    $region37: #{pgnet_forward.1} parent=1 // pred_fallthru
      _
    // Predicated region
    $region38: #{pgnet_forward.1} parent=1 // pred_check
      _
    $region39: #{pgnet_forward.1} parent=1 // pred_check_branch
      %70 = sbr.rel (0) target = $region41
    $region40: #{pgnet_forward.1} parent=1 // pred_region
      %72 = dma.done [#allocation5], 4096
    $region41: #{pgnet_forward.1} parent=1 // pred_fallthru
      _
    %v73 = vld [vmem:[%s0] sm:$0xff]
    %v74 = vld [vmem:[%s0 + $0x8] sm:$0xff]
    %v75 = vld [vmem:[%s0 + $0x10] sm:$0xff]
    %v76 = vld [vmem:[%s0 + $0x18] sm:$0xff]
    %v77 = vld [vmem:[#allocation2] sm:$0xff]
    %v78 = vld [vmem:[#allocation2 + $0x8] sm:$0xff]
    %v79 = vld [vmem:[#allocation2 + $0x10] sm:$0xff]
    %v80 = vld [vmem:[#allocation2 + $0x18] sm:$0xff]
    %v81 = vld [vmem:[#allocation2 + $0x20] sm:$0xff]
    %v82 = vld [vmem:[#allocation2 + $0x28] sm:$0xff]
    %v83 = vld [vmem:[#allocation2 + $0x30] sm:$0xff]
    %v84 = vld [vmem:[#allocation2 + $0x38] sm:$0xff]
    %v85 = vld [vmem:[#allocation2 + $0x40] sm:$0xff]
    %v86 = vld [vmem:[#allocation2 + $0x48] sm:$0xff]
    %v87 = vld [vmem:[#allocation2 + $0x50] sm:$0xff]
    %v88 = vld [vmem:[#allocation2 + $0x58] sm:$0xff]
    %v89 = vld [vmem:[#allocation2 + $0x60] sm:$0xff]
    %v90 = vld [vmem:[#allocation2 + $0x68] sm:$0xff]
    %v91 = vld [vmem:[#allocation2 + $0x70] sm:$0xff]
    %v92 = vld [vmem:[#allocation2 + $0x78] sm:$0xff]
    %v93 = vld [vmem:[#allocation2 + $0x80] sm:$0xff]
    %v94 = vld [vmem:[#allocation2 + $0x88] sm:$0xff]
    %v95 = vld [vmem:[#allocation2 + $0x90] sm:$0xff]
    %v96 = vld [vmem:[#allocation2 + $0x98] sm:$0xff]
    %v97 = vld [vmem:[#allocation2 + $0xa0] sm:$0xff]
    %v98 = vld [vmem:[#allocation2 + $0xa8] sm:$0xff]
    %v99 = vld [vmem:[#allocation2 + $0xb0] sm:$0xff]
    %v100 = vld [vmem:[#allocation2 + $0xb8] sm:$0xff]
    %v101 = vld [vmem:[#allocation2 + $0xc0] sm:$0xff]
    %v102 = vld [vmem:[#allocation2 + $0xc8] sm:$0xff]
    %v103 = vld [vmem:[#allocation2 + $0xd0] sm:$0xff]
    %v104 = vld [vmem:[#allocation2 + $0xd8] sm:$0xff]
    %v105 = vld [vmem:[#allocation2 + $0xe0] sm:$0xff]
    %v106 = vld [vmem:[#allocation2 + $0xe8] sm:$0xff]
    %v107 = vld [vmem:[#allocation2 + $0xf0] sm:$0xff]
    %v108 = vld [vmem:[#allocation2 + $0xf8] sm:$0xff]
    %v109 = vld [vmem:[#allocation2 + $0x100] sm:$0xff]
    %v110 = vld [vmem:[#allocation2 + $0x108] sm:$0xff]
    %v111 = vld [vmem:[#allocation2 + $0x110] sm:$0xff]
    %v112 = vld [vmem:[#allocation2 + $0x118] sm:$0xff]
    %v113 = vld [vmem:[#allocation2 + $0x120] sm:$0xff]
    %v114 = vld [vmem:[#allocation2 + $0x128] sm:$0xff]
    %v115 = vld [vmem:[#allocation2 + $0x130] sm:$0xff]
    %v116 = vld [vmem:[#allocation2 + $0x138] sm:$0xff]
    %v117 = vld [vmem:[#allocation2 + $0x140] sm:$0xff]
    %v118 = vld [vmem:[#allocation2 + $0x148] sm:$0xff]
    %v119 = vld [vmem:[#allocation2 + $0x150] sm:$0xff]
    %v120 = vld [vmem:[#allocation2 + $0x158] sm:$0xff]
    %v121 = vld [vmem:[#allocation2 + $0x160] sm:$0xff]
    %v122 = vld [vmem:[#allocation2 + $0x168] sm:$0xff]
    %v123 = vld [vmem:[#allocation2 + $0x170] sm:$0xff]
    %v124 = vld [vmem:[#allocation2 + $0x178] sm:$0xff]
    %v125 = vld [vmem:[#allocation2 + $0x180] sm:$0xff]
    %v126 = vld [vmem:[#allocation2 + $0x188] sm:$0xff]
    %v127 = vld [vmem:[#allocation2 + $0x190] sm:$0xff]
    %v128 = vld [vmem:[#allocation2 + $0x198] sm:$0xff]
    %v129 = vld [vmem:[#allocation2 + $0x1a0] sm:$0xff]
    %v130 = vld [vmem:[#allocation2 + $0x1a8] sm:$0xff]
    %v131 = vld [vmem:[#allocation2 + $0x1b0] sm:$0xff]
    %v132 = vld [vmem:[#allocation2 + $0x1b8] sm:$0xff]
    %v133 = vld [vmem:[#allocation2 + $0x1c0] sm:$0xff]
    %v134 = vld [vmem:[#allocation2 + $0x1c8] sm:$0xff]
    %v135 = vld [vmem:[#allocation2 + $0x1d0] sm:$0xff]
    %v136 = vld [vmem:[#allocation2 + $0x1d8] sm:$0xff]
    %v137 = vld [vmem:[#allocation2 + $0x1e0] sm:$0xff]
    %v138 = vld [vmem:[#allocation2 + $0x1e8] sm:$0xff]
    %v139 = vld [vmem:[#allocation2 + $0x1f0] sm:$0xff]
    %v140 = vld [vmem:[#allocation2 + $0x1f8] sm:$0xff]
    %v141 = vld [vmem:[#allocation2 + $0x200] sm:$0xff]
    %v142 = vld [vmem:[#allocation2 + $0x208] sm:$0xff]
    %v143 = vld [vmem:[#allocation2 + $0x210] sm:$0xff]
    %v144 = vld [vmem:[#allocation2 + $0x218] sm:$0xff]
    %v145 = vld [vmem:[#allocation2 + $0x220] sm:$0xff]
    %v146 = vld [vmem:[#allocation2 + $0x228] sm:$0xff]
    %v147 = vld [vmem:[#allocation2 + $0x230] sm:$0xff]
    %v148 = vld [vmem:[#allocation2 + $0x238] sm:$0xff]
    %v149 = vld [vmem:[#allocation2 + $0x240] sm:$0xff]
    %v150 = vld [vmem:[#allocation2 + $0x248] sm:$0xff]
    %v151 = vld [vmem:[#allocation2 + $0x250] sm:$0xff]
    %v152 = vld [vmem:[#allocation2 + $0x258] sm:$0xff]
    %v153 = vld [vmem:[#allocation2 + $0x260] sm:$0xff]
    %v154 = vld [vmem:[#allocation2 + $0x268] sm:$0xff]
    %v155 = vld [vmem:[#allocation2 + $0x270] sm:$0xff]
    %v156 = vld [vmem:[#allocation2 + $0x278] sm:$0xff]
    %v157 = vld [vmem:[#allocation2 + $0x280] sm:$0xff]
    %v158 = vld [vmem:[#allocation2 + $0x288] sm:$0xff]
    %v159 = vld [vmem:[#allocation2 + $0x290] sm:$0xff]
    %v160 = vld [vmem:[#allocation2 + $0x298] sm:$0xff]
    %v161 = vld [vmem:[#allocation2 + $0x2a0] sm:$0xff]
    %v162 = vld [vmem:[#allocation2 + $0x2a8] sm:$0xff]
    %v163 = vld [vmem:[#allocation2 + $0x2b0] sm:$0xff]
    %v164 = vld [vmem:[#allocation2 + $0x2b8] sm:$0xff]
    %v165 = vld [vmem:[#allocation2 + $0x2c0] sm:$0xff]
    %v166 = vld [vmem:[#allocation2 + $0x2c8] sm:$0xff]
    %v167 = vld [vmem:[#allocation2 + $0x2d0] sm:$0xff]
    %v168 = vld [vmem:[#allocation2 + $0x2d8] sm:$0xff]
    %v169 = vld [vmem:[#allocation2 + $0x2e0] sm:$0xff]
    %v170 = vld [vmem:[#allocation2 + $0x2e8] sm:$0xff]
    %v171 = vld [vmem:[#allocation2 + $0x2f0] sm:$0xff]
    %v172 = vld [vmem:[#allocation2 + $0x2f8] sm:$0xff]
    %v173 = vld [vmem:[#allocation2 + $0x300] sm:$0xff]
    %v174 = vld [vmem:[#allocation2 + $0x308] sm:$0xff]
    %v175 = vld [vmem:[#allocation2 + $0x310] sm:$0xff]
    %v176 = vld [vmem:[#allocation2 + $0x318] sm:$0xff]
    %v177 = vld [vmem:[#allocation2 + $0x320] sm:$0xff]
    %v178 = vld [vmem:[#allocation2 + $0x328] sm:$0xff]
    %v179 = vld [vmem:[#allocation2 + $0x330] sm:$0xff]
    %v180 = vld [vmem:[#allocation2 + $0x338] sm:$0xff]
    %v181 = vld [vmem:[#allocation2 + $0x340] sm:$0xff]
    %v182 = vld [vmem:[#allocation2 + $0x348] sm:$0xff]
    %v183 = vld [vmem:[#allocation2 + $0x350] sm:$0xff]
    %v184 = vld [vmem:[#allocation2 + $0x358] sm:$0xff]
    %v185 = vld [vmem:[#allocation2 + $0x360] sm:$0xff]
    %v186 = vld [vmem:[#allocation2 + $0x368] sm:$0xff]
    %v187 = vld [vmem:[#allocation2 + $0x370] sm:$0xff]
    %v188 = vld [vmem:[#allocation2 + $0x378] sm:$0xff]
    %v189 = vld [vmem:[#allocation2 + $0x380] sm:$0xff]
    %v190 = vld [vmem:[#allocation2 + $0x388] sm:$0xff]
    %v191 = vld [vmem:[#allocation2 + $0x390] sm:$0xff]
    %v192 = vld [vmem:[#allocation2 + $0x398] sm:$0xff]
    %v193 = vld [vmem:[#allocation2 + $0x3a0] sm:$0xff]
    %v194 = vld [vmem:[#allocation2 + $0x3a8] sm:$0xff]
    %v195 = vld [vmem:[#allocation2 + $0x3b0] sm:$0xff]
    %v196 = vld [vmem:[#allocation2 + $0x3b8] sm:$0xff]
    %v197 = vld [vmem:[#allocation2 + $0x3c0] sm:$0xff]
    %v198 = vld [vmem:[#allocation2 + $0x3c8] sm:$0xff]
    %v199 = vld [vmem:[#allocation2 + $0x3d0] sm:$0xff]
    %v200 = vld [vmem:[#allocation2 + $0x3d8] sm:$0xff]
    %v201 = vld [vmem:[#allocation2 + $0x3e0] sm:$0xff]
    %v202 = vld [vmem:[#allocation2 + $0x3e8] sm:$0xff]
    %v203 = vld [vmem:[#allocation2 + $0x3f0] sm:$0xff]
    %v204 = vld [vmem:[#allocation2 + $0x3f8] sm:$0xff]
    %v205 = vld [vmem:[%s2] sm:$0xf]
    %v207 = vperm.slane %v205, 0
    %v208 = vperm.slane %v205, 1
    %v209 = vperm.slane %v205, 2
    %v210 = vperm.slane %v205, 3
    %215 = vmatpush.msra.mxu0 %v137
    %216 = vmatpush.msra.mxu0 %v133
    %217 = vmatpush.msra.mxu0 %v129
    %218 = vmatpush.msra.mxu0 %v125
    %219 = vmatpush.msra.mxu0 %v121
    %220 = vmatpush.msra.mxu0 %v117
    %221 = vmatpush.msra.mxu0 %v113
    %222 = vmatpush.msra.mxu0 %v109
    %223 = vmatpush.msra.mxu0 %v105
    %224 = vmatpush.msra.mxu0 %v101
    %225 = vmatpush.msra.mxu0 %v97
    %226 = vmatpush.msra.mxu0 %v93
    %227 = vmatpush.msra.mxu0 %v89
    %228 = vmatpush.msra.mxu0 %v85
    %229 = vmatpush.msra.mxu0 %v81
    %230 = vmatpush.msra.mxu0 %v77
    %231 = vmatmul.f32.gmra.mxu0 %v73
    %v232 = vpop.f32.mrf.mxu0
    %v233 = vadd.f32 %v207, %v232
    %234 = vmatmul.f32.gmra.mxu0 %v75
    %v235 = vpop.f32.mrf.mxu0
    %v236 = vadd.f32 %v207, %v235
    %237 = vdwg.mxu0
    %238 = vmatpush.msra.mxu0 %v201
    %239 = vmatpush.msra.mxu0 %v197
    %240 = vmatpush.msra.mxu0 %v193
    %241 = vmatpush.msra.mxu0 %v189
    %242 = vmatpush.msra.mxu0 %v185
    %243 = vmatpush.msra.mxu0 %v181
    %244 = vmatpush.msra.mxu0 %v177
    %245 = vmatpush.msra.mxu0 %v173
    %246 = vmatpush.msra.mxu0 %v169
    %247 = vmatpush.msra.mxu0 %v165
    %248 = vmatpush.msra.mxu0 %v161
    %249 = vmatpush.msra.mxu0 %v157
    %250 = vmatpush.msra.mxu0 %v153
    %251 = vmatpush.msra.mxu0 %v149
    %252 = vmatpush.msra.mxu0 %v145
    %253 = vmatpush.msra.mxu0 %v141
    %254 = vmatmul.f32.gmra.mxu0 %v74
    %v255 = vpop.f32.mrf.mxu0
    %v256 = vadd.f32 %v233, %v255
    %257 = vmatmul.f32.gmra.mxu0 %v76
    %v258 = vpop.f32.mrf.mxu0
    %v259 = vadd.f32 %v236, %v258
    %260 = vdwg.mxu0
    %261 = vmatpush.msra.mxu0 %v138
    %262 = vmatpush.msra.mxu0 %v134
    %263 = vmatpush.msra.mxu0 %v130
    %264 = vmatpush.msra.mxu0 %v126
    %265 = vmatpush.msra.mxu0 %v122
    %266 = vmatpush.msra.mxu0 %v118
    %267 = vmatpush.msra.mxu0 %v114
    %268 = vmatpush.msra.mxu0 %v110
    %269 = vmatpush.msra.mxu0 %v106
    %270 = vmatpush.msra.mxu0 %v102
    %271 = vmatpush.msra.mxu0 %v98
    %272 = vmatpush.msra.mxu0 %v94
    %273 = vmatpush.msra.mxu0 %v90
    %274 = vmatpush.msra.mxu0 %v86
    %275 = vmatpush.msra.mxu0 %v82
    %276 = vmatpush.msra.mxu0 %v78
    %277 = vmatmul.f32.gmra.mxu0 %v73
    %v278 = vpop.f32.mrf.mxu0
    %v279 = vadd.f32 %v208, %v278
    %280 = vmatmul.f32.gmra.mxu0 %v75
    %v281 = vpop.f32.mrf.mxu0
    %v282 = vadd.f32 %v208, %v281
    %283 = vdwg.mxu0
    %284 = vmatpush.msra.mxu0 %v202
    %285 = vmatpush.msra.mxu0 %v198
    %286 = vmatpush.msra.mxu0 %v194
    %287 = vmatpush.msra.mxu0 %v190
    %288 = vmatpush.msra.mxu0 %v186
    %289 = vmatpush.msra.mxu0 %v182
    %290 = vmatpush.msra.mxu0 %v178
    %291 = vmatpush.msra.mxu0 %v174
    %292 = vmatpush.msra.mxu0 %v170
    %293 = vmatpush.msra.mxu0 %v166
    %294 = vmatpush.msra.mxu0 %v162
    %295 = vmatpush.msra.mxu0 %v158
    %296 = vmatpush.msra.mxu0 %v154
    %297 = vmatpush.msra.mxu0 %v150
    %298 = vmatpush.msra.mxu0 %v146
    %299 = vmatpush.msra.mxu0 %v142
    %300 = vmatmul.f32.gmra.mxu0 %v74
    %v301 = vpop.f32.mrf.mxu0
    %v302 = vadd.f32 %v279, %v301
    %303 = vmatmul.f32.gmra.mxu0 %v76
    %v304 = vpop.f32.mrf.mxu0
    %v305 = vadd.f32 %v282, %v304
    %306 = vdwg.mxu0
    %307 = vmatpush.msra.mxu0 %v139
    %308 = vmatpush.msra.mxu0 %v135
    %309 = vmatpush.msra.mxu0 %v131
    %310 = vmatpush.msra.mxu0 %v127
    %311 = vmatpush.msra.mxu0 %v123
    %312 = vmatpush.msra.mxu0 %v119
    %313 = vmatpush.msra.mxu0 %v115
    %314 = vmatpush.msra.mxu0 %v111
    %315 = vmatpush.msra.mxu0 %v107
    %316 = vmatpush.msra.mxu0 %v103
    %317 = vmatpush.msra.mxu0 %v99
    %318 = vmatpush.msra.mxu0 %v95
    %319 = vmatpush.msra.mxu0 %v91
    %320 = vmatpush.msra.mxu0 %v87
    %321 = vmatpush.msra.mxu0 %v83
    %322 = vmatpush.msra.mxu0 %v79
    %323 = vmatmul.f32.gmra.mxu0 %v73
    %v324 = vpop.f32.mrf.mxu0
    %v325 = vadd.f32 %v209, %v324
    %326 = vmatmul.f32.gmra.mxu0 %v75
    %v327 = vpop.f32.mrf.mxu0
    %v328 = vadd.f32 %v209, %v327
    %329 = vdwg.mxu0
    %330 = vmatpush.msra.mxu0 %v203
    %331 = vmatpush.msra.mxu0 %v199
    %332 = vmatpush.msra.mxu0 %v195
    %333 = vmatpush.msra.mxu0 %v191
    %334 = vmatpush.msra.mxu0 %v187
    %335 = vmatpush.msra.mxu0 %v183
    %336 = vmatpush.msra.mxu0 %v179
    %337 = vmatpush.msra.mxu0 %v175
    %338 = vmatpush.msra.mxu0 %v171
    %339 = vmatpush.msra.mxu0 %v167
    %340 = vmatpush.msra.mxu0 %v163
    %341 = vmatpush.msra.mxu0 %v159
    %342 = vmatpush.msra.mxu0 %v155
    %343 = vmatpush.msra.mxu0 %v151
    %344 = vmatpush.msra.mxu0 %v147
    %345 = vmatpush.msra.mxu0 %v143
    %346 = vmatmul.f32.gmra.mxu0 %v74
    %v347 = vpop.f32.mrf.mxu0
    %v348 = vadd.f32 %v325, %v347
    %349 = vmatmul.f32.gmra.mxu0 %v76
    %v350 = vpop.f32.mrf.mxu0
    %v351 = vadd.f32 %v328, %v350
    %352 = vdwg.mxu0
    %353 = vmatpush.msra.mxu0 %v140
    %354 = vmatpush.msra.mxu0 %v136
    %355 = vmatpush.msra.mxu0 %v132
    %356 = vmatpush.msra.mxu0 %v128
    %357 = vmatpush.msra.mxu0 %v124
    %358 = vmatpush.msra.mxu0 %v120
    %359 = vmatpush.msra.mxu0 %v116
    %360 = vmatpush.msra.mxu0 %v112
    %361 = vmatpush.msra.mxu0 %v108
    %362 = vmatpush.msra.mxu0 %v104
    %363 = vmatpush.msra.mxu0 %v100
    %364 = vmatpush.msra.mxu0 %v96
    %365 = vmatpush.msra.mxu0 %v92
    %366 = vmatpush.msra.mxu0 %v88
    %367 = vmatpush.msra.mxu0 %v84
    %368 = vmatpush.msra.mxu0 %v80
    %369 = vmatmul.f32.gmra.mxu0 %v73
    %v370 = vpop.f32.mrf.mxu0
    %v371 = vadd.f32 %v210, %v370
    %372 = vmatmul.f32.gmra.mxu0 %v75
    %v373 = vpop.f32.mrf.mxu0
    %v374 = vadd.f32 %v210, %v373
    %375 = vdwg.mxu0
    %376 = vmatpush.msra.mxu0 %v204
    %377 = vmatpush.msra.mxu0 %v200
    %378 = vmatpush.msra.mxu0 %v196
    %379 = vmatpush.msra.mxu0 %v192
    %380 = vmatpush.msra.mxu0 %v188
    %381 = vmatpush.msra.mxu0 %v184
    %382 = vmatpush.msra.mxu0 %v180
    %383 = vmatpush.msra.mxu0 %v176
    %384 = vmatpush.msra.mxu0 %v172
    %385 = vmatpush.msra.mxu0 %v168
    %386 = vmatpush.msra.mxu0 %v164
    %387 = vmatpush.msra.mxu0 %v160
    %388 = vmatpush.msra.mxu0 %v156
    %389 = vmatpush.msra.mxu0 %v152
    %390 = vmatpush.msra.mxu0 %v148
    %391 = vmatpush.msra.mxu0 %v144
    %392 = vmatmul.f32.gmra.mxu0 %v74
    %v393 = vpop.f32.mrf.mxu0
    %v394 = vadd.f32 %v371, %v393
    %395 = vmatmul.f32.gmra.mxu0 %v76
    %v396 = vpop.f32.mrf.mxu0
    %v397 = vadd.f32 %v374, %v396
    %398 = vdwg.mxu0
    %v399 = vmax.f32 %v256, 0.0
    %v400 = vmax.f32 %v302, 0.0
    %v401 = vmax.f32 %v348, 0.0
    %v402 = vmax.f32 %v394, 0.0
    %v403 = vmax.f32 %v259, 0.0
    %v404 = vmax.f32 %v305, 0.0
    %v405 = vmax.f32 %v351, 0.0
    %v406 = vmax.f32 %v397, 0.0
    %v407 = vld [vmem:[#allocation4] sm:$0xff]
    %v408 = vld [vmem:[#allocation4 + $0x8] sm:$0xff]
    %v409 = vld [vmem:[#allocation4 + $0x10] sm:$0xff]
    %v410 = vld [vmem:[#allocation4 + $0x18] sm:$0xff]
    %v411 = vld [vmem:[#allocation4 + $0x20] sm:$0xff]
    %v412 = vld [vmem:[#allocation4 + $0x28] sm:$0xff]
    %v413 = vld [vmem:[#allocation4 + $0x30] sm:$0xff]
    %v414 = vld [vmem:[#allocation4 + $0x38] sm:$0xff]
    %v415 = vld [vmem:[#allocation4 + $0x40] sm:$0xff]
    %v416 = vld [vmem:[#allocation4 + $0x48] sm:$0xff]
    %v417 = vld [vmem:[#allocation4 + $0x50] sm:$0xff]
    %v418 = vld [vmem:[#allocation4 + $0x58] sm:$0xff]
    %v419 = vld [vmem:[#allocation4 + $0x60] sm:$0xff]
    %v420 = vld [vmem:[#allocation4 + $0x68] sm:$0xff]
    %v421 = vld [vmem:[#allocation4 + $0x70] sm:$0xff]
    %v422 = vld [vmem:[#allocation4 + $0x78] sm:$0xff]
    %v423 = vld [vmem:[#allocation4 + $0x80] sm:$0xff]
    %v424 = vld [vmem:[#allocation4 + $0x88] sm:$0xff]
    %v425 = vld [vmem:[#allocation4 + $0x90] sm:$0xff]
    %v426 = vld [vmem:[#allocation4 + $0x98] sm:$0xff]
    %v427 = vld [vmem:[#allocation4 + $0xa0] sm:$0xff]
    %v428 = vld [vmem:[#allocation4 + $0xa8] sm:$0xff]
    %v429 = vld [vmem:[#allocation4 + $0xb0] sm:$0xff]
    %v430 = vld [vmem:[#allocation4 + $0xb8] sm:$0xff]
    %v431 = vld [vmem:[#allocation4 + $0xc0] sm:$0xff]
    %v432 = vld [vmem:[#allocation4 + $0xc8] sm:$0xff]
    %v433 = vld [vmem:[#allocation4 + $0xd0] sm:$0xff]
    %v434 = vld [vmem:[#allocation4 + $0xd8] sm:$0xff]
    %v435 = vld [vmem:[#allocation4 + $0xe0] sm:$0xff]
    %v436 = vld [vmem:[#allocation4 + $0xe8] sm:$0xff]
    %v437 = vld [vmem:[#allocation4 + $0xf0] sm:$0xff]
    %v438 = vld [vmem:[#allocation4 + $0xf8] sm:$0xff]
    %v439 = vld [vmem:[#allocation4 + $0x100] sm:$0xff]
    %v440 = vld [vmem:[#allocation4 + $0x108] sm:$0xff]
    %v441 = vld [vmem:[#allocation4 + $0x110] sm:$0xff]
    %v442 = vld [vmem:[#allocation4 + $0x118] sm:$0xff]
    %v443 = vld [vmem:[#allocation4 + $0x120] sm:$0xff]
    %v444 = vld [vmem:[#allocation4 + $0x128] sm:$0xff]
    %v445 = vld [vmem:[#allocation4 + $0x130] sm:$0xff]
    %v446 = vld [vmem:[#allocation4 + $0x138] sm:$0xff]
    %v447 = vld [vmem:[#allocation4 + $0x140] sm:$0xff]
    %v448 = vld [vmem:[#allocation4 + $0x148] sm:$0xff]
    %v449 = vld [vmem:[#allocation4 + $0x150] sm:$0xff]
    %v450 = vld [vmem:[#allocation4 + $0x158] sm:$0xff]
    %v451 = vld [vmem:[#allocation4 + $0x160] sm:$0xff]
    %v452 = vld [vmem:[#allocation4 + $0x168] sm:$0xff]
    %v453 = vld [vmem:[#allocation4 + $0x170] sm:$0xff]
    %v454 = vld [vmem:[#allocation4 + $0x178] sm:$0xff]
    %v455 = vld [vmem:[#allocation4 + $0x180] sm:$0xff]
    %v456 = vld [vmem:[#allocation4 + $0x188] sm:$0xff]
    %v457 = vld [vmem:[#allocation4 + $0x190] sm:$0xff]
    %v458 = vld [vmem:[#allocation4 + $0x198] sm:$0xff]
    %v459 = vld [vmem:[#allocation4 + $0x1a0] sm:$0xff]
    %v460 = vld [vmem:[#allocation4 + $0x1a8] sm:$0xff]
    %v461 = vld [vmem:[#allocation4 + $0x1b0] sm:$0xff]
    %v462 = vld [vmem:[#allocation4 + $0x1b8] sm:$0xff]
    %v463 = vld [vmem:[#allocation4 + $0x1c0] sm:$0xff]
    %v464 = vld [vmem:[#allocation4 + $0x1c8] sm:$0xff]
    %v465 = vld [vmem:[#allocation4 + $0x1d0] sm:$0xff]
    %v466 = vld [vmem:[#allocation4 + $0x1d8] sm:$0xff]
    %v467 = vld [vmem:[#allocation4 + $0x1e0] sm:$0xff]
    %v468 = vld [vmem:[#allocation4 + $0x1e8] sm:$0xff]
    %v469 = vld [vmem:[#allocation4 + $0x1f0] sm:$0xff]
    %v470 = vld [vmem:[#allocation4 + $0x1f8] sm:$0xff]
    %v471 = vld [vmem:[#allocation4 + $0x200] sm:$0xff]
    %v472 = vld [vmem:[#allocation4 + $0x208] sm:$0xff]
    %v473 = vld [vmem:[#allocation4 + $0x210] sm:$0xff]
    %v474 = vld [vmem:[#allocation4 + $0x218] sm:$0xff]
    %v475 = vld [vmem:[#allocation4 + $0x220] sm:$0xff]
    %v476 = vld [vmem:[#allocation4 + $0x228] sm:$0xff]
    %v477 = vld [vmem:[#allocation4 + $0x230] sm:$0xff]
    %v478 = vld [vmem:[#allocation4 + $0x238] sm:$0xff]
    %v479 = vld [vmem:[#allocation4 + $0x240] sm:$0xff]
    %v480 = vld [vmem:[#allocation4 + $0x248] sm:$0xff]
    %v481 = vld [vmem:[#allocation4 + $0x250] sm:$0xff]
    %v482 = vld [vmem:[#allocation4 + $0x258] sm:$0xff]
    %v483 = vld [vmem:[#allocation4 + $0x260] sm:$0xff]
    %v484 = vld [vmem:[#allocation4 + $0x268] sm:$0xff]
    %v485 = vld [vmem:[#allocation4 + $0x270] sm:$0xff]
    %v486 = vld [vmem:[#allocation4 + $0x278] sm:$0xff]
    %v487 = vld [vmem:[#allocation4 + $0x280] sm:$0xff]
    %v488 = vld [vmem:[#allocation4 + $0x288] sm:$0xff]
    %v489 = vld [vmem:[#allocation4 + $0x290] sm:$0xff]
    %v490 = vld [vmem:[#allocation4 + $0x298] sm:$0xff]
    %v491 = vld [vmem:[#allocation4 + $0x2a0] sm:$0xff]
    %v492 = vld [vmem:[#allocation4 + $0x2a8] sm:$0xff]
    %v493 = vld [vmem:[#allocation4 + $0x2b0] sm:$0xff]
    %v494 = vld [vmem:[#allocation4 + $0x2b8] sm:$0xff]
    %v495 = vld [vmem:[#allocation4 + $0x2c0] sm:$0xff]
    %v496 = vld [vmem:[#allocation4 + $0x2c8] sm:$0xff]
    %v497 = vld [vmem:[#allocation4 + $0x2d0] sm:$0xff]
    %v498 = vld [vmem:[#allocation4 + $0x2d8] sm:$0xff]
    %v499 = vld [vmem:[#allocation4 + $0x2e0] sm:$0xff]
    %v500 = vld [vmem:[#allocation4 + $0x2e8] sm:$0xff]
    %v501 = vld [vmem:[#allocation4 + $0x2f0] sm:$0xff]
    %v502 = vld [vmem:[#allocation4 + $0x2f8] sm:$0xff]
    %v503 = vld [vmem:[#allocation4 + $0x300] sm:$0xff]
    %v504 = vld [vmem:[#allocation4 + $0x308] sm:$0xff]
    %v505 = vld [vmem:[#allocation4 + $0x310] sm:$0xff]
    %v506 = vld [vmem:[#allocation4 + $0x318] sm:$0xff]
    %v507 = vld [vmem:[#allocation4 + $0x320] sm:$0xff]
    %v508 = vld [vmem:[#allocation4 + $0x328] sm:$0xff]
    %v509 = vld [vmem:[#allocation4 + $0x330] sm:$0xff]
    %v510 = vld [vmem:[#allocation4 + $0x338] sm:$0xff]
    %v511 = vld [vmem:[#allocation4 + $0x340] sm:$0xff]
    %v512 = vld [vmem:[#allocation4 + $0x348] sm:$0xff]
    %v513 = vld [vmem:[#allocation4 + $0x350] sm:$0xff]
    %v514 = vld [vmem:[#allocation4 + $0x358] sm:$0xff]
    %v515 = vld [vmem:[#allocation4 + $0x360] sm:$0xff]
    %v516 = vld [vmem:[#allocation4 + $0x368] sm:$0xff]
    %v517 = vld [vmem:[#allocation4 + $0x370] sm:$0xff]
    %v518 = vld [vmem:[#allocation4 + $0x378] sm:$0xff]
    %v519 = vld [vmem:[#allocation4 + $0x380] sm:$0xff]
    %v520 = vld [vmem:[#allocation4 + $0x388] sm:$0xff]
    %v521 = vld [vmem:[#allocation4 + $0x390] sm:$0xff]
    %v522 = vld [vmem:[#allocation4 + $0x398] sm:$0xff]
    %v523 = vld [vmem:[#allocation4 + $0x3a0] sm:$0xff]
    %v524 = vld [vmem:[#allocation4 + $0x3a8] sm:$0xff]
    %v525 = vld [vmem:[#allocation4 + $0x3b0] sm:$0xff]
    %v526 = vld [vmem:[#allocation4 + $0x3b8] sm:$0xff]
    %v527 = vld [vmem:[#allocation4 + $0x3c0] sm:$0xff]
    %v528 = vld [vmem:[#allocation4 + $0x3c8] sm:$0xff]
    %v529 = vld [vmem:[#allocation4 + $0x3d0] sm:$0xff]
    %v530 = vld [vmem:[#allocation4 + $0x3d8] sm:$0xff]
    %v531 = vld [vmem:[#allocation4 + $0x3e0] sm:$0xff]
    %v532 = vld [vmem:[#allocation4 + $0x3e8] sm:$0xff]
    %v533 = vld [vmem:[#allocation4 + $0x3f0] sm:$0xff]
    %v534 = vld [vmem:[#allocation4 + $0x3f8] sm:$0xff]
    %v535 = vld [vmem:[%s4] sm:$0x3]
    %v537 = vperm.slane %v535, 0
    %v538 = vperm.slane %v535, 1
    %541 = vmatpush.msra.mxu0 %v437
    %542 = vmatpush.msra.mxu0 %v435
    %543 = vmatpush.msra.mxu0 %v433
    %544 = vmatpush.msra.mxu0 %v431
    %545 = vmatpush.msra.mxu0 %v429
    %546 = vmatpush.msra.mxu0 %v427
    %547 = vmatpush.msra.mxu0 %v425
    %548 = vmatpush.msra.mxu0 %v423
    %549 = vmatpush.msra.mxu0 %v421
    %550 = vmatpush.msra.mxu0 %v419
    %551 = vmatpush.msra.mxu0 %v417
    %552 = vmatpush.msra.mxu0 %v415
    %553 = vmatpush.msra.mxu0 %v413
    %554 = vmatpush.msra.mxu0 %v411
    %555 = vmatpush.msra.mxu0 %v409
    %556 = vmatpush.msra.mxu0 %v407
    %557 = vmatmul.f32.gmra.mxu0 %v399
    %v558 = vpop.f32.mrf.mxu0
    %v559 = vadd.f32 %v537, %v558
    %560 = vmatmul.f32.gmra.mxu0 %v403
    %v561 = vpop.f32.mrf.mxu0
    %v562 = vadd.f32 %v537, %v561
    %563 = vdwg.mxu0
    %564 = vmatpush.msra.mxu0 %v469
    %565 = vmatpush.msra.mxu0 %v467
    %566 = vmatpush.msra.mxu0 %v465
    %567 = vmatpush.msra.mxu0 %v463
    %568 = vmatpush.msra.mxu0 %v461
    %569 = vmatpush.msra.mxu0 %v459
    %570 = vmatpush.msra.mxu0 %v457
    %571 = vmatpush.msra.mxu0 %v455
    %572 = vmatpush.msra.mxu0 %v453
    %573 = vmatpush.msra.mxu0 %v451
    %574 = vmatpush.msra.mxu0 %v449
    %575 = vmatpush.msra.mxu0 %v447
    %576 = vmatpush.msra.mxu0 %v445
    %577 = vmatpush.msra.mxu0 %v443
    %578 = vmatpush.msra.mxu0 %v441
    %579 = vmatpush.msra.mxu0 %v439
    %580 = vmatmul.f32.gmra.mxu0 %v400
    %v581 = vpop.f32.mrf.mxu0
    %v582 = vadd.f32 %v559, %v581
    %583 = vmatmul.f32.gmra.mxu0 %v404
    %v584 = vpop.f32.mrf.mxu0
    %v585 = vadd.f32 %v562, %v584
    %586 = vdwg.mxu0
    %587 = vmatpush.msra.mxu0 %v501
    %588 = vmatpush.msra.mxu0 %v499
    %589 = vmatpush.msra.mxu0 %v497
    %590 = vmatpush.msra.mxu0 %v495
    %591 = vmatpush.msra.mxu0 %v493
    %592 = vmatpush.msra.mxu0 %v491
    %593 = vmatpush.msra.mxu0 %v489
    %594 = vmatpush.msra.mxu0 %v487
    %595 = vmatpush.msra.mxu0 %v485
    %596 = vmatpush.msra.mxu0 %v483
    %597 = vmatpush.msra.mxu0 %v481
    %598 = vmatpush.msra.mxu0 %v479
    %599 = vmatpush.msra.mxu0 %v477
    %600 = vmatpush.msra.mxu0 %v475
    %601 = vmatpush.msra.mxu0 %v473
    %602 = vmatpush.msra.mxu0 %v471
    %603 = vmatmul.f32.gmra.mxu0 %v401
    %v604 = vpop.f32.mrf.mxu0
    %v605 = vadd.f32 %v582, %v604
    %606 = vmatmul.f32.gmra.mxu0 %v405
    %v607 = vpop.f32.mrf.mxu0
    %v608 = vadd.f32 %v585, %v607
    %609 = vdwg.mxu0
    %610 = vmatpush.msra.mxu0 %v533
    %611 = vmatpush.msra.mxu0 %v531
    %612 = vmatpush.msra.mxu0 %v529
    %613 = vmatpush.msra.mxu0 %v527
    %614 = vmatpush.msra.mxu0 %v525
    %615 = vmatpush.msra.mxu0 %v523
    %616 = vmatpush.msra.mxu0 %v521
    %617 = vmatpush.msra.mxu0 %v519
    %618 = vmatpush.msra.mxu0 %v517
    %619 = vmatpush.msra.mxu0 %v515
    %620 = vmatpush.msra.mxu0 %v513
    %621 = vmatpush.msra.mxu0 %v511
    %622 = vmatpush.msra.mxu0 %v509
    %623 = vmatpush.msra.mxu0 %v507
    %624 = vmatpush.msra.mxu0 %v505
    %625 = vmatpush.msra.mxu0 %v503
    %626 = vmatmul.f32.gmra.mxu0 %v402
    %v627 = vpop.f32.mrf.mxu0
    %v628 = vadd.f32 %v605, %v627
    %629 = vmatmul.f32.gmra.mxu0 %v406
    %v630 = vpop.f32.mrf.mxu0
    %v631 = vadd.f32 %v608, %v630
    %632 = vdwg.mxu0
    %633 = vmatpush.msra.mxu0 %v438
    %634 = vmatpush.msra.mxu0 %v436
    %635 = vmatpush.msra.mxu0 %v434
    %636 = vmatpush.msra.mxu0 %v432
    %637 = vmatpush.msra.mxu0 %v430
    %638 = vmatpush.msra.mxu0 %v428
    %639 = vmatpush.msra.mxu0 %v426
    %640 = vmatpush.msra.mxu0 %v424
    %641 = vmatpush.msra.mxu0 %v422
    %642 = vmatpush.msra.mxu0 %v420
    %643 = vmatpush.msra.mxu0 %v418
    %644 = vmatpush.msra.mxu0 %v416
    %645 = vmatpush.msra.mxu0 %v414
    %646 = vmatpush.msra.mxu0 %v412
    %647 = vmatpush.msra.mxu0 %v410
    %648 = vmatpush.msra.mxu0 %v408
    %649 = vmatmul.f32.gmra.mxu0 %v399
    %v650 = vpop.f32.mrf.mxu0
    %v651 = vadd.f32 %v538, %v650
    %652 = vmatmul.f32.gmra.mxu0 %v403
    %v653 = vpop.f32.mrf.mxu0
    %v654 = vadd.f32 %v538, %v653
    %655 = vdwg.mxu0
    %656 = vmatpush.msra.mxu0 %v470
    %657 = vmatpush.msra.mxu0 %v468
    %658 = vmatpush.msra.mxu0 %v466
    %659 = vmatpush.msra.mxu0 %v464
    %660 = vmatpush.msra.mxu0 %v462
    %661 = vmatpush.msra.mxu0 %v460
    %662 = vmatpush.msra.mxu0 %v458
    %663 = vmatpush.msra.mxu0 %v456
    %664 = vmatpush.msra.mxu0 %v454
    %665 = vmatpush.msra.mxu0 %v452
    %666 = vmatpush.msra.mxu0 %v450
    %667 = vmatpush.msra.mxu0 %v448
    %668 = vmatpush.msra.mxu0 %v446
    %669 = vmatpush.msra.mxu0 %v444
    %670 = vmatpush.msra.mxu0 %v442
    %671 = vmatpush.msra.mxu0 %v440
    %672 = vmatmul.f32.gmra.mxu0 %v400
    %v673 = vpop.f32.mrf.mxu0
    %v674 = vadd.f32 %v651, %v673
    %675 = vmatmul.f32.gmra.mxu0 %v404
    %v676 = vpop.f32.mrf.mxu0
    %v677 = vadd.f32 %v654, %v676
    %678 = vdwg.mxu0
    %679 = vmatpush.msra.mxu0 %v502
    %680 = vmatpush.msra.mxu0 %v500
    %681 = vmatpush.msra.mxu0 %v498
    %682 = vmatpush.msra.mxu0 %v496
    %683 = vmatpush.msra.mxu0 %v494
    %684 = vmatpush.msra.mxu0 %v492
    %685 = vmatpush.msra.mxu0 %v490
    %686 = vmatpush.msra.mxu0 %v488
    %687 = vmatpush.msra.mxu0 %v486
    %688 = vmatpush.msra.mxu0 %v484
    %689 = vmatpush.msra.mxu0 %v482
    %690 = vmatpush.msra.mxu0 %v480
    %691 = vmatpush.msra.mxu0 %v478
    %692 = vmatpush.msra.mxu0 %v476
    %693 = vmatpush.msra.mxu0 %v474
    %694 = vmatpush.msra.mxu0 %v472
    %695 = vmatmul.f32.gmra.mxu0 %v401
    %v696 = vpop.f32.mrf.mxu0
    %v697 = vadd.f32 %v674, %v696
    %698 = vmatmul.f32.gmra.mxu0 %v405
    %v699 = vpop.f32.mrf.mxu0
    %v700 = vadd.f32 %v677, %v699
    %701 = vdwg.mxu0
    %702 = vmatpush.msra.mxu0 %v534
    %703 = vmatpush.msra.mxu0 %v532
    %704 = vmatpush.msra.mxu0 %v530
    %705 = vmatpush.msra.mxu0 %v528
    %706 = vmatpush.msra.mxu0 %v526
    %707 = vmatpush.msra.mxu0 %v524
    %708 = vmatpush.msra.mxu0 %v522
    %709 = vmatpush.msra.mxu0 %v520
    %710 = vmatpush.msra.mxu0 %v518
    %711 = vmatpush.msra.mxu0 %v516
    %712 = vmatpush.msra.mxu0 %v514
    %713 = vmatpush.msra.mxu0 %v512
    %714 = vmatpush.msra.mxu0 %v510
    %715 = vmatpush.msra.mxu0 %v508
    %716 = vmatpush.msra.mxu0 %v506
    %717 = vmatpush.msra.mxu0 %v504
    %718 = vmatmul.f32.gmra.mxu0 %v402
    %v719 = vpop.f32.mrf.mxu0
    %v720 = vadd.f32 %v697, %v719
    %721 = vmatmul.f32.gmra.mxu0 %v406
    %v722 = vpop.f32.mrf.mxu0
    %v723 = vadd.f32 %v700, %v722
    %724 = vdwg.mxu0
    %v725 = vmax.f32 %v628, 0.0
    %v726 = vmax.f32 %v720, 0.0
    %v727 = vmax.f32 %v631, 0.0
    %v728 = vmax.f32 %v723, 0.0
    %v729 = vld [vmem:[#allocation6] sm:$0xff]
    %v730 = vld [vmem:[#allocation6 + $0x8] sm:$0xff]
    %v731 = vld [vmem:[#allocation6 + $0x10] sm:$0xff]
    %v732 = vld [vmem:[#allocation6 + $0x18] sm:$0xff]
    %v733 = vld [vmem:[#allocation6 + $0x20] sm:$0xff]
    %v734 = vld [vmem:[#allocation6 + $0x28] sm:$0xff]
    %v735 = vld [vmem:[#allocation6 + $0x30] sm:$0xff]
    %v736 = vld [vmem:[#allocation6 + $0x38] sm:$0xff]
    %v737 = vld [vmem:[#allocation6 + $0x40] sm:$0xff]
    %v738 = vld [vmem:[#allocation6 + $0x48] sm:$0xff]
    %v739 = vld [vmem:[#allocation6 + $0x50] sm:$0xff]
    %v740 = vld [vmem:[#allocation6 + $0x58] sm:$0xff]
    %v741 = vld [vmem:[#allocation6 + $0x60] sm:$0xff]
    %v742 = vld [vmem:[#allocation6 + $0x68] sm:$0xff]
    %v743 = vld [vmem:[#allocation6 + $0x70] sm:$0xff]
    %v744 = vld [vmem:[#allocation6 + $0x78] sm:$0xff]
    %v745 = vld [vmem:[#allocation6 + $0x80] sm:$0xff]
    %v746 = vld [vmem:[#allocation6 + $0x88] sm:$0xff]
    %v747 = vld [vmem:[#allocation6 + $0x90] sm:$0xff]
    %v748 = vld [vmem:[#allocation6 + $0x98] sm:$0xff]
    %v749 = vld [vmem:[#allocation6 + $0xa0] sm:$0xff]
    %v750 = vld [vmem:[#allocation6 + $0xa8] sm:$0xff]
    %v751 = vld [vmem:[#allocation6 + $0xb0] sm:$0xff]
    %v752 = vld [vmem:[#allocation6 + $0xb8] sm:$0xff]
    %v753 = vld [vmem:[#allocation6 + $0xc0] sm:$0xff]
    %v754 = vld [vmem:[#allocation6 + $0xc8] sm:$0xff]
    %v755 = vld [vmem:[#allocation6 + $0xd0] sm:$0xff]
    %v756 = vld [vmem:[#allocation6 + $0xd8] sm:$0xff]
    %v757 = vld [vmem:[#allocation6 + $0xe0] sm:$0xff]
    %v758 = vld [vmem:[#allocation6 + $0xe8] sm:$0xff]
    %v759 = vld [vmem:[#allocation6 + $0xf0] sm:$0xff]
    %v760 = vld [vmem:[#allocation6 + $0xf8] sm:$0xff]
    %v761 = vld [vmem:[%s6] sm:$0x1]
    %v763 = vperm.slane %v761, 0
    %765 = vmatpush.msra.mxu0 %v744
    %766 = vmatpush.msra.mxu0 %v743
    %767 = vmatpush.msra.mxu0 %v742
    %768 = vmatpush.msra.mxu0 %v741
    %769 = vmatpush.msra.mxu0 %v740
    %770 = vmatpush.msra.mxu0 %v739
    %771 = vmatpush.msra.mxu0 %v738
    %772 = vmatpush.msra.mxu0 %v737
    %773 = vmatpush.msra.mxu0 %v736
    %774 = vmatpush.msra.mxu0 %v735
    %775 = vmatpush.msra.mxu0 %v734
    %776 = vmatpush.msra.mxu0 %v733
    %777 = vmatpush.msra.mxu0 %v732
    %778 = vmatpush.msra.mxu0 %v731
    %779 = vmatpush.msra.mxu0 %v730
    %780 = vmatpush.msra.mxu0 %v729
    %781 = vmatmul.f32.gmra.mxu0 %v725
    %v782 = vpop.f32.mrf.mxu0
    %v783 = vadd.f32 %v763, %v782
    %784 = vmatmul.f32.gmra.mxu0 %v727
    %v785 = vpop.f32.mrf.mxu0
    %v786 = vadd.f32 %v763, %v785
    %787 = vdwg.mxu0
    %788 = vmatpush.msra.mxu0 %v760
    %789 = vmatpush.msra.mxu0 %v759
    %790 = vmatpush.msra.mxu0 %v758
    %791 = vmatpush.msra.mxu0 %v757
    %792 = vmatpush.msra.mxu0 %v756
    %793 = vmatpush.msra.mxu0 %v755
    %794 = vmatpush.msra.mxu0 %v754
    %795 = vmatpush.msra.mxu0 %v753
    %796 = vmatpush.msra.mxu0 %v752
    %797 = vmatpush.msra.mxu0 %v751
    %798 = vmatpush.msra.mxu0 %v750
    %799 = vmatpush.msra.mxu0 %v749
    %800 = vmatpush.msra.mxu0 %v748
    %801 = vmatpush.msra.mxu0 %v747
    %802 = vmatpush.msra.mxu0 %v746
    %803 = vmatpush.msra.mxu0 %v745
    %804 = vmatmul.f32.gmra.mxu0 %v726
    %v805 = vpop.f32.mrf.mxu0
    %v806 = vadd.f32 %v783, %v805
    %807 = vmatmul.f32.gmra.mxu0 %v728
    %v808 = vpop.f32.mrf.mxu0
    %v809 = vadd.f32 %v786, %v808
    %810 = vdwg.mxu0
    %811 = vmax.xlane.f32.xlu0 %v806
    %v812 = vpop.xlane.xlu0 %811
    %813 = vmax.xlane.f32.xlu0 %v809
    %v814 = vpop.xlane.xlu0 %813
    %v815 = vsub.f32 %v806, %v812
    %v816 = vsub.f32 %v809, %v814
    %v817 = vmul.f32 %v815, 1.442695
    %v818 = vpow.pop %v817
    %v819 = vmul.f32 %v816, 1.442695
    %v820 = vpow.pop %v819
    %821 = vadd.xlane.f32.xlu0 %v818
    %v822 = vpop.xlane.xlu0 %821
    %823 = vadd.xlane.f32.xlu0 %v820
    %v824 = vpop.xlane.xlu0 %823
    %v825 = vrcp.pop %v822
    %v826 = vmul.f32 %v822, %v825
    %v827 = vsub.f32 1.0, %v826
    %v828 = vmul.f32 %v825, %v827
    %v829 = vadd.f32 %v825, %v828
    %vm830 = vweird.f32 %v822
    %vm831 = vweird.f32 %v825
    %vm832 = vmor %vm830, %vm831
    %v833 = vsel %vm832, %v825, %v829
    %v834 = vand.u32 2147483647, %v822
    %vm835 = vcmp.eq.f32.partialorder %v834, 8.507059e+37
    %v836 = vand.u32 %v822, 2147483648
    %v837 = vor.u32 1.1754944e-38, %v836
    %v838 = vsel %vm835, %v837, %v833
    %v839 = vmul.f32 %v818, %v838
    %v840 = vrcp.pop %v824
    %v841 = vmul.f32 %v824, %v840
    %v842 = vsub.f32 1.0, %v841
    %v843 = vmul.f32 %v840, %v842
    %v844 = vadd.f32 %v840, %v843
    %vm845 = vweird.f32 %v824
    %vm846 = vweird.f32 %v840
    %vm847 = vmor %vm845, %vm846
    %v848 = vsel %vm847, %v840, %v844
    %v849 = vand.u32 2147483647, %v824
    %vm850 = vcmp.eq.f32.partialorder %v849, 8.507059e+37
    %v851 = vand.u32 %v824, 2147483648
    %v852 = vor.u32 1.1754944e-38, %v851
    %v853 = vsel %vm850, %v852, %v848
    %v854 = vmul.f32 %v820, %v853
    %855 = vst [vmem:[%s7] sm:$0xff] %v839
    %856 = vst [vmem:[%s7 + $0x8] sm:$0xff] %v854
    // Predicated region
    $region42: #{pgnet_forward.1} parent=1 // pred_check
      _
    $region43: #{pgnet_forward.1} parent=1 // pred_check_branch
      %858 = sbr.rel (0) target = $region45
    $region44: #{pgnet_forward.1} parent=1 // pred_region
      _
    $region45: #{pgnet_forward.1} parent=1 // pred_fallthru
      _
    // Predicated region
    $region46: #{pgnet_forward.1} parent=1 // pred_check
      _
    $region47: #{pgnet_forward.1} parent=1 // pred_check_branch
      %860 = sbr.rel (0) target = $region49
    $region48: #{pgnet_forward.1} parent=1 // pred_region
      _
    $region49: #{pgnet_forward.1} parent=1 // pred_fallthru
      _
    %861 = vsyncpa [#allocation3], 1
    %862 = vsyncpa [#allocation5], 1

</llo_original>
